<compile_context>
chip_gen: v7x
topology: tpu7x:2x2x1
jax: 0.10.0
libtpu: 0.0.40
codegen_flags: <defaults>
</compile_context>

<pallas_src>
import jax
import jax.numpy as jnp
from jax.experimental import pallas as pl
from jax.experimental.pallas import tpu as pltpu

INPUT_SIZE = 784
HIDDEN = 50
NUM_CLASSES = 10

OUT_PAD = 128    # lane-dense output slab (10 -> 128)
TM_MAX = 1024    # batch tile cap: fits v5e 16 MiB scoped VMEM with f32 x double-buffered


def _round_up(a, m):
    return (a + m - 1) // m * m


def mlp_kernel(x_ref, w_ref, b_ref, o_ref):
    # f32 x tile straight from HBM; cast to bf16 on the VPU (hidden under DMA),
    # one MXU GEMM with f32 accumulation, f32 bias add, lane-dense bf16 store.
    x_bf = x_ref[...].astype(jnp.bfloat16)
    acc = jnp.dot(x_bf, w_ref[...], preferred_element_type=jnp.float32)
    o_ref[...] = (acc + b_ref[...]).astype(o_ref.dtype)


def prepare_params(w1, b1, w2, b2):
    """One-time parameter prep (hoisted out of the per-call forward):
    fuse the two linears, pad out-dim 10 -> 128, cast fused weight to bf16."""
    w_fused = jnp.dot(w1, w2, preferred_element_type=jnp.float32)        # [784, 10]
    b_fused = jnp.dot(b1, w2, preferred_element_type=jnp.float32) + b2   # [1, 10]
    w_pad = jnp.zeros((INPUT_SIZE, OUT_PAD), jnp.float32).at[:, :NUM_CLASSES].set(w_fused)
    b_pad = jnp.zeros((1, OUT_PAD), jnp.float32).at[:, :NUM_CLASSES].set(b_fused)
    return w_pad.astype(jnp.bfloat16), b_pad


@jax.jit
def nn_forward(x, w_fused_bf, b_fused):
    """x: [B, 784] f32; w_fused_bf: [784, 128] bf16; b_fused: [1, 128] f32.
    Returns [B, 10] f32 == fc2(fc1(x)) (bf16 MXU inputs, f32 accumulation)."""
    B = x.shape[0]

    # Batch tile: aim for >= 2 grid blocks (v7x has 2 TensorCores), round to the
    # f32 sublane granule (8), cap at TM_MAX.  cdiv grid -> Pallas handles the
    # ragged last tile; no batch over-padding, no wasted DMA/MXU work.
    TM = min(TM_MAX, _round_up(pl.cdiv(B, 2), 8))
    grid = (pl.cdiv(B, TM),)

    cost = pl.CostEstimate(
        flops=2 * B * INPUT_SIZE * OUT_PAD,
        transcendentals=0,
        bytes_accessed=(B * INPUT_SIZE * 4        # f32 x read
                        + w_fused_bf.size * 2     # bf16 fused weight (resident)
                        + b_fused.size * 4        # f32 fused bias (resident)
                        + B * OUT_PAD * 2),       # bf16 output slab
    )

    out_pad = pl.pallas_call(
        mlp_kernel,
        out_shape=jax.ShapeDtypeStruct((B, OUT_PAD), jnp.bfloat16),
        grid_spec=pltpu.PrefetchScalarGridSpec(
            num_scalar_prefetch=0,
            grid=grid,
            in_specs=[
                # x: f32, last dim = full 784 (satisfies (8,128) rule), batch-tiled,
                # double-buffered HBM->VMEM by the BlockSpec pipeline.
                pl.BlockSpec((TM, INPUT_SIZE), lambda i: (i, 0)),
                # fused weight / bias: constant index_map -> VMEM-resident.
                pl.BlockSpec((INPUT_SIZE, OUT_PAD), lambda i: (0, 0)),
                pl.BlockSpec((1, OUT_PAD), lambda i: (0, 0)),
            ],
            out_specs=pl.BlockSpec((TM, OUT_PAD), lambda i: (i, 0)),
        ),
        compiler_params=pltpu.CompilerParams(
            dimension_semantics=("parallel",),   # megacore sharding on v7x
        ),
        cost_estimate=cost,
    )(x, w_fused_bf, b_fused)

    return out_pad[:, :NUM_CLASSES].astype(jnp.float32)


def init_params(key):
    """Deterministic init matching PyTorch Linear shapes.
    Weights stored pre-transposed as [in_features, out_features]."""
    k1, k2, k3, k4 = jax.random.split(key, 4)
    bound1 = 1.0 / (INPUT_SIZE ** 0.5)
    bound2 = 1.0 / (HIDDEN ** 0.5)
    w1 = jax.random.uniform(k1, (INPUT_SIZE, HIDDEN), jnp.float32, -bound1, bound1)
    b1 = jax.random.uniform(k2, (1, HIDDEN), jnp.float32, -bound1, bound1)
    w2 = jax.random.uniform(k3, (HIDDEN, NUM_CLASSES), jnp.float32, -bound2, bound2)
    b2 = jax.random.uniform(k4, (1, NUM_CLASSES), jnp.float32, -bound2, bound2)
    return w1, b1, w2, b2


if __name__ == "__main__":
    key = jax.random.PRNGKey(0)
    kx, kp = jax.random.split(key)
    batch = 8
    x = jax.random.normal(kx, (batch, INPUT_SIZE), jnp.float32)
    w1, b1, w2, b2 = init_params(kp)

    # One-time parameter prep (weight fusion + padding + bf16 cast).
    w_fused_bf, b_fused = prepare_params(w1, b1, w2, b2)

    out = nn_forward(x, w_fused_bf, b_fused)
    out = jax.block_until_ready(out)

    # Reference check against plain JAX (exact two-matmul f32 path).
    ref = (x @ w1 + b1) @ w2 + b2
    assert out.shape == (batch, NUM_CLASSES)
    # bf16 MXU inputs / bf16 output slab with f32 accumulation -> relaxed tolerance.
    assert jnp.allclose(out, ref, atol=2e-2, rtol=2e-2), float(jnp.max(jnp.abs(out - ref)))

    print("KERNEL_OK")
</pallas_src>

<mosaic_0001>
module attributes {stable_mosaic.version = 11 : i64} {
  func.func @mlp_kernel(%arg0: i32, %arg1: memref<8x784xf32, #tpu.memory_space<vmem>>, %arg2: memref<784x128xbf16, #tpu.memory_space<vmem>>, %arg3: memref<1x128xf32, #tpu.memory_space<vmem>>, %arg4: memref<8x128xbf16, #tpu.memory_space<vmem>>) attributes {dimension_semantics = [#tpu.dimension_semantics<parallel>], iteration_bounds = array<i64: 1>, scalar_prefetch = 0 : i64, scratch_operands = 0 : i64, tpu.core_type = #tpu.core_type<tc>, window_params = [{transform_indices = @transform_0, window_bounds = array<i64: 8, 784>}, {pipeline_mode = #tpu.pipeline_mode<synchronous>, transform_indices = @transform_1, window_bounds = array<i64: 784, 128>}, {pipeline_mode = #tpu.pipeline_mode<synchronous>, transform_indices = @transform_2, window_bounds = array<i64: 1, 128>}, {transform_indices = @transform_3, window_bounds = array<i64: 8, 128>}]} {
    %c0 = arith.constant 0 : index
    %c0_0 = arith.constant 0 : index
    %0 = vector.load %arg1[%c0, %c0_0] : memref<8x784xf32, #tpu.memory_space<vmem>>, vector<8x784xf32>
    %1 = arith.truncf %0 : vector<8x784xf32> to vector<8x784xbf16>
    %c0_1 = arith.constant 0 : index
    %c0_2 = arith.constant 0 : index
    %2 = vector.load %arg2[%c0_1, %c0_2] : memref<784x128xbf16, #tpu.memory_space<vmem>>, vector<784x128xbf16>
    %cst = arith.constant dense<0.000000e+00> : vector<8x128xf32>
    %3 = tpu.matmul %1, %2, %cst {dimension_numbers = #tpu.dot_dimension_numbers<[1], [0], [0], [1], [0, 0, 1, 1], [], []>} : vector<8x784xbf16>, vector<784x128xbf16>, vector<8x128xf32> -> vector<8x128xf32>
    %c0_3 = arith.constant 0 : index
    %c0_4 = arith.constant 0 : index
    %4 = vector.load %arg3[%c0_3, %c0_4] : memref<1x128xf32, #tpu.memory_space<vmem>>, vector<1x128xf32>
    %5 = vector.broadcast %4 : vector<1x128xf32> to vector<8x128xf32>
    %6 = arith.addf %3, %5 : vector<8x128xf32>
    %7 = arith.truncf %6 : vector<8x128xf32> to vector<8x128xbf16>
    %c0_5 = arith.constant 0 : index
    %c0_6 = arith.constant 0 : index
    %8 = vector.load %arg4[%c0_5, %c0_6] : memref<8x128xbf16, #tpu.memory_space<vmem>>, vector<8x128xbf16>
    tpu.vector_store %arg4[%c0_5, %c0_6], %7 {strides = array<i32>} : memref<8x128xbf16, #tpu.memory_space<vmem>>, vector<8x128xbf16>,
    return
  }
  func.func @transform_0(%arg0: i32) -> (i32, i32) {
    %c0_i32 = arith.constant 0 : i32
    %c0_i32_0 = arith.constant 0 : i32
    return %arg0, %c0_i32 : i32, i32
  }
  func.func @transform_1(%arg0: i32) -> (i32, i32) {
    %c0_i32 = arith.constant 0 : i32
    %c0_i32_0 = arith.constant 0 : i32
    %c0_i32_1 = arith.constant 0 : i32
    return %c0_i32, %c0_i32_0 : i32, i32
  }
  func.func @transform_2(%arg0: i32) -> (i32, i32) {
    %c0_i32 = arith.constant 0 : i32
    %c0_i32_0 = arith.constant 0 : i32
    %c0_i32_1 = arith.constant 0 : i32
    return %c0_i32, %c0_i32_0 : i32, i32
  }
  func.func @transform_3(%arg0: i32) -> (i32, i32) {
    %c0_i32 = arith.constant 0 : i32
    %c0_i32_0 = arith.constant 0 : i32
    return %arg0, %c0_i32 : i32, i32
  }
}

</mosaic_0001>

<llo_original>
// kernel: nn_forward.1
$region0: #{nn_forward.1}
  #allocation0 [shape = 'u32[]', space=smem, size = 0x4, offset = 0x4, fixed_abs, tag = 'smem constant byte address 0x4 - core index']
  #allocation1 [shape = 'u32[144,128]{1,0:T(1,128)}', space=vmem, size = 0x12000, scoped, tag = 'internal scratch']
  %s0 = inlined_call_operand.hbm [shape: f32[8,784], index: 0, kind: input, shape index: {}]
  %s1 = inlined_call_operand.hbm [shape: bf16[784,128], index: 1, kind: input, shape index: {}]
  %s2 = inlined_call_operand.vmem [shape: f32[1,128], index: 2, kind: input, shape index: {}]
  %s3 = inlined_call_operand.vmem [shape: bf16[8,128], index: 3, kind: output, shape index: {}]
  %s4 = sld [smem:[#allocation0]]
  $region30: #{nn_forward.1} parent=0
    _
  %s6 = ssub.s32 1, %s4
  %s7 = scalar_select 0, %s6, %s4
  $region1: #{nn_forward.1} parent=0
    #allocation2 [shape = 'u8[28672]{0}', space=vmem, size = 0x7000, scoped, tag = 'input window, operand 0, single buffered']
    #allocation3 [shape = 's32[1]{0}', space=sflag, size = 0x4, scoped, tag = 'scoped memory for nn_forward.1']
    #allocation4 [shape = 'u8[200704]{0}', space=vmem, size = 0x31000, scoped, tag = 'input window, operand 1, single buffered']
    #allocation5 [shape = 's32[1]{0}', space=sflag, size = 0x4, scoped, tag = 'scoped memory for nn_forward.1']
    %8 = vsyncpa [#allocation3], 0
    %9 = vsyncpa [#allocation5], 0
    // Predicated region
    $region2: #{nn_forward.1} parent=1 // pred_check
      _
    $region3: #{nn_forward.1} parent=1 // pred_check_branch
      %11 = sbr.rel (0) target = $region5
    $region4: #{nn_forward.1} parent=1 // pred_region
      %s13 = ssub.s32 896, 896
      %14 = vsyncadd [#allocation3], %s13
      %s16 = sshll.u32 [#allocation2], 4
      %s17 = int_to_ptr.vmem [resolvable:$true] %s16
      %19 = dma.hbm_to_vmem [thread:$0]  %s0, 896, %s17, [#allocation3]
    $region5: #{nn_forward.1} parent=1 // pred_fallthru
      _
    // Predicated region
    $region6: #{nn_forward.1} parent=1 // pred_check
      _
    $region7: #{nn_forward.1} parent=1 // pred_check_branch
      %21 = sbr.rel (0) target = $region9
    $region8: #{nn_forward.1} parent=1 // pred_region
      %s23 = ssub.s32 6272, 6272
      %24 = vsyncadd [#allocation5], %s23
      %s25 = sshll.u32 [#allocation4], 4
      %s26 = int_to_ptr.vmem [resolvable:$true] %s25
      %31 = dma.hbm_to_vmem [thread:$0]  %s1, 6272, %s26, [#allocation5], 64, 64, 4
    $region9: #{nn_forward.1} parent=1 // pred_fallthru
      _
    // Predicated region
    $region10: #{nn_forward.1} parent=1 // pred_check
      _
    $region11: #{nn_forward.1} parent=1 // pred_check_branch
      %33 = sbr.rel (0) target = $region13
    $region12: #{nn_forward.1} parent=1 // pred_region
      _
    $region13: #{nn_forward.1} parent=1 // pred_fallthru
      _
    // Predicated region
    $region14: #{nn_forward.1} parent=1 // pred_check
      _
    $region15: #{nn_forward.1} parent=1 // pred_check_branch
      %35 = sbr.rel (0) target = $region17
    $region16: #{nn_forward.1} parent=1 // pred_region
      %36 = dma.done [#allocation3], 896
    $region17: #{nn_forward.1} parent=1 // pred_fallthru
      _
    // Predicated region
    $region18: #{nn_forward.1} parent=1 // pred_check
      _
    $region19: #{nn_forward.1} parent=1 // pred_check_branch
      %38 = sbr.rel (0) target = $region21
    $region20: #{nn_forward.1} parent=1 // pred_region
      %39 = dma.done [#allocation5], 6272
    $region21: #{nn_forward.1} parent=1 // pred_fallthru
      _
    %v41 = vld [vmem:[#allocation2] sm:$0xff]
    %v42 = vld [vmem:[#allocation2 + $0x8] sm:$0xff]
    %v43 = vld [vmem:[#allocation2 + $0x10] sm:$0xff]
    %v44 = vld [vmem:[#allocation2 + $0x18] sm:$0xff]
    %v45 = vld [vmem:[#allocation2 + $0x20] sm:$0xff]
    %v46 = vld [vmem:[#allocation2 + $0x28] sm:$0xff]
    %v47 = vld [vmem:[#allocation2 + $0x30] sm:$0xff]
    %v48 = vpack.c.bf16 %v41, %v41
    %v49 = vpack.c.bf16 %v42, %v42
    %v50 = vpack.c.bf16 %v43, %v43
    %v51 = vpack.c.bf16 %v44, %v44
    %v52 = vpack.c.bf16 %v45, %v45
    %v53 = vpack.c.bf16 %v46, %v46
    %v54 = vpack.c.bf16 %v47, %v47
    %v55 = vld [vmem:[#allocation4] sm:$0xf]
    %v56 = vld [vmem:[#allocation4 + $0x4] sm:$0xf]
    %v57 = vld [vmem:[#allocation4 + $0x8] sm:$0xf]
    %v58 = vld [vmem:[#allocation4 + $0xc] sm:$0xf]
    %v59 = vld [vmem:[#allocation4 + $0x10] sm:$0xf]
    %v60 = vld [vmem:[#allocation4 + $0x14] sm:$0xf]
    %v61 = vld [vmem:[#allocation4 + $0x18] sm:$0xf]
    %v62 = vld [vmem:[#allocation4 + $0x1c] sm:$0xf]
    %v63 = vld [vmem:[#allocation4 + $0x20] sm:$0xf]
    %v64 = vld [vmem:[#allocation4 + $0x24] sm:$0xf]
    %v65 = vld [vmem:[#allocation4 + $0x28] sm:$0xf]
    %v66 = vld [vmem:[#allocation4 + $0x2c] sm:$0xf]
    %v67 = vld [vmem:[#allocation4 + $0x30] sm:$0xf]
    %v68 = vld [vmem:[#allocation4 + $0x34] sm:$0xf]
    %v69 = vld [vmem:[#allocation4 + $0x38] sm:$0xf]
    %v70 = vld [vmem:[#allocation4 + $0x3c] sm:$0xf]
    %v71 = vld [vmem:[#allocation4 + $0x40] sm:$0xf]
    %v72 = vld [vmem:[#allocation4 + $0x44] sm:$0xf]
    %v73 = vld [vmem:[#allocation4 + $0x48] sm:$0xf]
    %v74 = vld [vmem:[#allocation4 + $0x4c] sm:$0xf]
    %v75 = vld [vmem:[#allocation4 + $0x50] sm:$0xf]
    %v76 = vld [vmem:[#allocation4 + $0x54] sm:$0xf]
    %v77 = vld [vmem:[#allocation4 + $0x58] sm:$0xf]
    %v78 = vld [vmem:[#allocation4 + $0x5c] sm:$0xf]
    %v79 = vld [vmem:[#allocation4 + $0x60] sm:$0xf]
    %v80 = vld [vmem:[#allocation4 + $0x64] sm:$0xf]
    %v81 = vld [vmem:[#allocation4 + $0x68] sm:$0xf]
    %v82 = vld [vmem:[#allocation4 + $0x6c] sm:$0xf]
    %v83 = vld [vmem:[#allocation4 + $0x70] sm:$0xf]
    %v84 = vld [vmem:[#allocation4 + $0x74] sm:$0xf]
    %v85 = vld [vmem:[#allocation4 + $0x78] sm:$0xf]
    %v86 = vld [vmem:[#allocation4 + $0x7c] sm:$0xf]
    %v87 = vld [vmem:[#allocation4 + $0x80] sm:$0xf]
    %v88 = vld [vmem:[#allocation4 + $0x84] sm:$0xf]
    %v89 = vld [vmem:[#allocation4 + $0x88] sm:$0xf]
    %v90 = vld [vmem:[#allocation4 + $0x8c] sm:$0xf]
    %v91 = vld [vmem:[#allocation4 + $0x90] sm:$0xf]
    %v92 = vld [vmem:[#allocation4 + $0x94] sm:$0xf]
    %v93 = vld [vmem:[#allocation4 + $0x98] sm:$0xf]
    %v94 = vld [vmem:[#allocation4 + $0x9c] sm:$0xf]
    %v95 = vld [vmem:[#allocation4 + $0xa0] sm:$0xf]
    %v96 = vld [vmem:[#allocation4 + $0xa4] sm:$0xf]
    %v97 = vld [vmem:[#allocation4 + $0xa8] sm:$0xf]
    %v98 = vld [vmem:[#allocation4 + $0xac] sm:$0xf]
    %v99 = vld [vmem:[#allocation4 + $0xb0] sm:$0xf]
    %v100 = vld [vmem:[#allocation4 + $0xb4] sm:$0xf]
    %v101 = vld [vmem:[#allocation4 + $0xb8] sm:$0xf]
    %v102 = vld [vmem:[#allocation4 + $0xbc] sm:$0xf]
    %v103 = vld [vmem:[#allocation4 + $0xc0] sm:$0xf]
    %v104 = vld [vmem:[#allocation4 + $0xc4] sm:$0xf]
    %v105 = vld [vmem:[#allocation4 + $0xc8] sm:$0xf]
    %v106 = vld [vmem:[#allocation4 + $0xcc] sm:$0xf]
    %v107 = vld [vmem:[#allocation4 + $0xd0] sm:$0xf]
    %v108 = vld [vmem:[#allocation4 + $0xd4] sm:$0xf]
    %v109 = vld [vmem:[#allocation4 + $0xd8] sm:$0xf]
    %v110 = vld [vmem:[#allocation4 + $0xdc] sm:$0xf]
    %v111 = vld [vmem:[#allocation4 + $0xe0] sm:$0xf]
    %v112 = vld [vmem:[#allocation4 + $0xe4] sm:$0xf]
    %v113 = vld [vmem:[#allocation4 + $0xe8] sm:$0xf]
    %v114 = vld [vmem:[#allocation4 + $0xec] sm:$0xf]
    %v115 = vld [vmem:[#allocation4 + $0xf0] sm:$0xf]
    %v116 = vld [vmem:[#allocation4 + $0xf4] sm:$0xf]
    %v117 = vld [vmem:[#allocation4 + $0xf8] sm:$0xf]
    %v118 = vld [vmem:[#allocation4 + $0xfc] sm:$0xf]
    %v119 = vld [vmem:[#allocation4 + $0x100] sm:$0xf]
    %v120 = vld [vmem:[#allocation4 + $0x104] sm:$0xf]
    %v121 = vld [vmem:[#allocation4 + $0x108] sm:$0xf]
    %v122 = vld [vmem:[#allocation4 + $0x10c] sm:$0xf]
    %v123 = vld [vmem:[#allocation4 + $0x110] sm:$0xf]
    %v124 = vld [vmem:[#allocation4 + $0x114] sm:$0xf]
    %v125 = vld [vmem:[#allocation4 + $0x118] sm:$0xf]
    %v126 = vld [vmem:[#allocation4 + $0x11c] sm:$0xf]
    %v127 = vld [vmem:[#allocation4 + $0x120] sm:$0xf]
    %v128 = vld [vmem:[#allocation4 + $0x124] sm:$0xf]
    %v129 = vld [vmem:[#allocation4 + $0x128] sm:$0xf]
    %v130 = vld [vmem:[#allocation4 + $0x12c] sm:$0xf]
    %v131 = vld [vmem:[#allocation4 + $0x130] sm:$0xf]
    %v132 = vld [vmem:[#allocation4 + $0x134] sm:$0xf]
    %v133 = vld [vmem:[#allocation4 + $0x138] sm:$0xf]
    %v134 = vld [vmem:[#allocation4 + $0x13c] sm:$0xf]
    %v135 = vld [vmem:[#allocation4 + $0x140] sm:$0xf]
    %v136 = vld [vmem:[#allocation4 + $0x144] sm:$0xf]
    %v137 = vld [vmem:[#allocation4 + $0x148] sm:$0xf]
    %v138 = vld [vmem:[#allocation4 + $0x14c] sm:$0xf]
    %v139 = vld [vmem:[#allocation4 + $0x150] sm:$0xf]
    %v140 = vld [vmem:[#allocation4 + $0x154] sm:$0xf]
    %v141 = vld [vmem:[#allocation4 + $0x158] sm:$0xf]
    %v142 = vld [vmem:[#allocation4 + $0x15c] sm:$0xf]
    %v143 = vld [vmem:[#allocation4 + $0x160] sm:$0xf]
    %v144 = vld [vmem:[#allocation4 + $0x164] sm:$0xf]
    %v145 = vld [vmem:[#allocation4 + $0x168] sm:$0xf]
    %v146 = vld [vmem:[#allocation4 + $0x16c] sm:$0xf]
    %v147 = vld [vmem:[#allocation4 + $0x170] sm:$0xf]
    %v148 = vld [vmem:[#allocation4 + $0x174] sm:$0xf]
    %v149 = vld [vmem:[#allocation4 + $0x178] sm:$0xf]
    %v150 = vld [vmem:[#allocation4 + $0x17c] sm:$0xf]
    %v151 = vld [vmem:[#allocation4 + $0x180] sm:$0xf]
    %v152 = vld [vmem:[#allocation4 + $0x184] sm:$0xf]
    %v153 = vld [vmem:[%s2] sm:$0x1]
    %v155 = vlaneseq
    %v156 = vshrl.u32 %v155, 7
    %v157 = vsub.s32 0, %v156
    %v158 = vrot.slane %v153, %v157
    %v258 = vunpack.c.l.b16 %v55
    %v259 = vunpack.c.l.b16 %v56
    %v260 = vunpack.c.l.b16 %v57
    %v261 = vunpack.c.l.b16 %v58
    %v262 = vunpack.c.l.b16 %v59
    %v263 = vunpack.c.l.b16 %v60
    %v264 = vunpack.c.l.b16 %v61
    %v265 = vunpack.c.l.b16 %v62
    %v266 = vunpack.c.l.b16 %v63
    %v267 = vunpack.c.l.b16 %v64
    %v268 = vunpack.c.l.b16 %v65
    %v269 = vunpack.c.l.b16 %v66
    %v270 = vunpack.c.l.b16 %v67
    %v271 = vunpack.c.l.b16 %v68
    %v272 = vunpack.c.l.b16 %v69
    %v273 = vunpack.c.l.b16 %v70
    %v274 = vunpack.c.l.b16 %v71
    %v275 = vunpack.c.l.b16 %v72
    %v276 = vunpack.c.l.b16 %v73
    %v277 = vunpack.c.l.b16 %v74
    %v278 = vunpack.c.l.b16 %v75
    %v279 = vunpack.c.l.b16 %v76
    %v280 = vunpack.c.l.b16 %v77
    %v281 = vunpack.c.l.b16 %v78
    %v282 = vunpack.c.l.b16 %v79
    %v283 = vunpack.c.l.b16 %v80
    %v284 = vunpack.c.l.b16 %v81
    %v285 = vunpack.c.l.b16 %v82
    %v286 = vunpack.c.l.b16 %v83
    %v287 = vunpack.c.l.b16 %v84
    %v288 = vunpack.c.l.b16 %v85
    %v289 = vunpack.c.l.b16 %v86
    %v290 = vunpack.c.l.b16 %v87
    %v291 = vunpack.c.l.b16 %v88
    %v292 = vunpack.c.l.b16 %v89
    %v293 = vunpack.c.l.b16 %v90
    %v294 = vunpack.c.l.b16 %v91
    %v295 = vunpack.c.l.b16 %v92
    %v296 = vunpack.c.l.b16 %v93
    %v297 = vunpack.c.l.b16 %v94
    %v298 = vunpack.c.l.b16 %v95
    %v299 = vunpack.c.l.b16 %v96
    %v300 = vunpack.c.l.b16 %v97
    %v301 = vunpack.c.l.b16 %v98
    %v302 = vunpack.c.l.b16 %v99
    %v303 = vunpack.c.l.b16 %v100
    %v304 = vunpack.c.l.b16 %v101
    %v305 = vunpack.c.l.b16 %v102
    %v306 = vunpack.c.l.b16 %v103
    %v307 = vunpack.c.l.b16 %v104
    %v308 = vunpack.c.l.b16 %v105
    %v309 = vunpack.c.l.b16 %v106
    %v310 = vunpack.c.l.b16 %v107
    %v311 = vunpack.c.l.b16 %v108
    %v312 = vunpack.c.l.b16 %v109
    %v313 = vunpack.c.l.b16 %v110
    %v314 = vunpack.c.l.b16 %v111
    %v315 = vunpack.c.l.b16 %v112
    %v316 = vunpack.c.l.b16 %v113
    %v317 = vunpack.c.l.b16 %v114
    %v318 = vunpack.c.l.b16 %v115
    %v319 = vunpack.c.l.b16 %v116
    %v320 = vunpack.c.l.b16 %v117
    %v321 = vunpack.c.l.b16 %v118
    %v322 = vunpack.c.l.b16 %v119
    %v323 = vunpack.c.l.b16 %v120
    %v324 = vunpack.c.l.b16 %v121
    %v325 = vunpack.c.l.b16 %v122
    %v326 = vunpack.c.l.b16 %v123
    %v327 = vunpack.c.l.b16 %v124
    %v328 = vunpack.c.l.b16 %v125
    %v329 = vunpack.c.l.b16 %v126
    %v330 = vunpack.c.l.b16 %v127
    %v331 = vunpack.c.l.b16 %v128
    %v332 = vunpack.c.l.b16 %v129
    %v333 = vunpack.c.l.b16 %v130
    %v334 = vunpack.c.l.b16 %v131
    %v335 = vunpack.c.l.b16 %v132
    %v336 = vunpack.c.l.b16 %v133
    %v337 = vunpack.c.l.b16 %v134
    %v338 = vunpack.c.l.b16 %v135
    %v339 = vunpack.c.l.b16 %v136
    %v340 = vunpack.c.l.b16 %v137
    %v341 = vunpack.c.l.b16 %v138
    %v342 = vunpack.c.l.b16 %v139
    %v343 = vunpack.c.l.b16 %v140
    %v344 = vunpack.c.l.b16 %v141
    %v345 = vunpack.c.l.b16 %v142
    %v346 = vunpack.c.l.b16 %v143
    %v347 = vunpack.c.l.b16 %v144
    %v348 = vunpack.c.l.b16 %v145
    %v349 = vunpack.c.l.b16 %v146
    %v350 = vunpack.c.l.b16 %v147
    %v351 = vunpack.c.l.b16 %v148
    %v352 = vunpack.c.l.b16 %v149
    %v353 = vunpack.c.l.b16 %v150
    %v354 = vunpack.c.l.b16 %v151
    %v355 = vunpack.c.l.b16 %v152
    %v356 = vpack.c.b16 %v259, %v258
    %v357 = vpack.c.b16 %v261, %v260
    %v358 = vpack.c.b16 %v263, %v262
    %v359 = vpack.c.b16 %v265, %v264
    %v360 = vpack.c.b16 %v267, %v266
    %v361 = vpack.c.b16 %v269, %v268
    %v362 = vpack.c.b16 %v271, %v270
    %v363 = vpack.c.b16 %v273, %v272
    %v364 = vpack.c.b16 %v275, %v274
    %v365 = vpack.c.b16 %v277, %v276
    %v366 = vpack.c.b16 %v279, %v278
    %v367 = vpack.c.b16 %v281, %v280
    %v368 = vpack.c.b16 %v283, %v282
    %v369 = vpack.c.b16 %v285, %v284
    %v370 = vpack.c.b16 %v287, %v286
    %v371 = vpack.c.b16 %v289, %v288
    %v372 = vpack.c.b16 %v291, %v290
    %v373 = vpack.c.b16 %v293, %v292
    %v374 = vpack.c.b16 %v295, %v294
    %v375 = vpack.c.b16 %v297, %v296
    %v376 = vpack.c.b16 %v299, %v298
    %v377 = vpack.c.b16 %v301, %v300
    %v378 = vpack.c.b16 %v303, %v302
    %v379 = vpack.c.b16 %v305, %v304
    %v380 = vpack.c.b16 %v307, %v306
    %v381 = vpack.c.b16 %v309, %v308
    %v382 = vpack.c.b16 %v311, %v310
    %v383 = vpack.c.b16 %v313, %v312
    %v384 = vpack.c.b16 %v315, %v314
    %v385 = vpack.c.b16 %v317, %v316
    %v386 = vpack.c.b16 %v319, %v318
    %v387 = vpack.c.b16 %v321, %v320
    %v388 = vpack.c.b16 %v323, %v322
    %v389 = vpack.c.b16 %v325, %v324
    %v390 = vpack.c.b16 %v327, %v326
    %v391 = vpack.c.b16 %v329, %v328
    %v392 = vpack.c.b16 %v331, %v330
    %v393 = vpack.c.b16 %v333, %v332
    %v394 = vpack.c.b16 %v335, %v334
    %v395 = vpack.c.b16 %v337, %v336
    %v396 = vpack.c.b16 %v339, %v338
    %v397 = vpack.c.b16 %v341, %v340
    %v398 = vpack.c.b16 %v343, %v342
    %v399 = vpack.c.b16 %v345, %v344
    %v400 = vpack.c.b16 %v347, %v346
    %v401 = vpack.c.b16 %v349, %v348
    %v402 = vpack.c.b16 %v351, %v350
    %v403 = vpack.c.b16 %v353, %v352
    %v404 = vpack.c.b16 %v355, %v354
    %vm454 = vcmask 130048
    %v456 = vsel %vm454, %v54, 0
    %458 = vmatprep.subr.bf16.mxu0 0
    %459 = vmatpush1.bf16.msra.mxu0 %v356
    %460 = vmatprep.subr.bf16.mxu0 0
    %461 = vmatpush1.bf16.msra.mxu0 %v357
    %462 = vmatprep.subr.bf16.mxu0 0
    %463 = vmatpush1.bf16.msra.mxu0 %v358
    %464 = vmatprep.subr.bf16.mxu0 0
    %465 = vmatpush1.bf16.msra.mxu0 %v359
    %466 = vmatprep.subr.bf16.mxu0 0
    %467 = vmatpush1.bf16.msra.mxu0 %v360
    %468 = vmatprep.subr.bf16.mxu0 0
    %469 = vmatpush1.bf16.msra.mxu0 %v361
    %470 = vmatprep.subr.bf16.mxu0 0
    %471 = vmatpush1.bf16.msra.mxu0 %v362
    %472 = vmatprep.subr.bf16.mxu0 0
    %473 = vmatpush1.bf16.msra.mxu0 %v363
    %474 = vmatprep.subr.bf16.mxu0 0
    %475 = vmatpush1.bf16.msra.mxu0 %v364
    %476 = vmatprep.subr.bf16.mxu0 0
    %477 = vmatpush1.bf16.msra.mxu0 %v365
    %478 = vmatprep.subr.bf16.mxu0 0
    %479 = vmatpush1.bf16.msra.mxu0 %v366
    %480 = vmatprep.subr.bf16.mxu0 0
    %481 = vmatpush1.bf16.msra.mxu0 %v367
    %482 = vmatprep.subr.bf16.mxu0 0
    %483 = vmatpush1.bf16.msra.mxu0 %v368
    %484 = vmatprep.subr.bf16.mxu0 0
    %485 = vmatpush1.bf16.msra.mxu0 %v369
    %486 = vmatprep.subr.bf16.mxu0 0
    %487 = vmatpush1.bf16.msra.mxu0 %v370
    %488 = vmatprep.subr.bf16.mxu0 0
    %489 = vmatpush1.bf16.msra.mxu0 %v371
    %490 = vmatprep.mubr.bf16.mxu0 %v49
    %491 = vmatmul.mubr.bf16.gmra.mrb[0].mxu0 %v48
    %v492 = vpop.f32.mrb[0].mxu0
    %v493 = vadd.f32 %v158, %v492
    %v494 = vpop.f32.mrb[0].mxu0
    %v495 = vpop.f32.mrb[0].mxu0
    %v496 = vpop.f32.mrb[0].mxu0
    %497 = vdwg.mxu0
    %498 = vmatprep.subr.bf16.mxu0 0
    %499 = vmatpush1.bf16.msra.mxu0 %v372
    %500 = vmatprep.subr.bf16.mxu0 0
    %501 = vmatpush1.bf16.msra.mxu0 %v373
    %502 = vmatprep.subr.bf16.mxu0 0
    %503 = vmatpush1.bf16.msra.mxu0 %v374
    %504 = vmatprep.subr.bf16.mxu0 0
    %505 = vmatpush1.bf16.msra.mxu0 %v375
    %506 = vmatprep.subr.bf16.mxu0 0
    %507 = vmatpush1.bf16.msra.mxu0 %v376
    %508 = vmatprep.subr.bf16.mxu0 0
    %509 = vmatpush1.bf16.msra.mxu0 %v377
    %510 = vmatprep.subr.bf16.mxu0 0
    %511 = vmatpush1.bf16.msra.mxu0 %v378
    %512 = vmatprep.subr.bf16.mxu0 0
    %513 = vmatpush1.bf16.msra.mxu0 %v379
    %514 = vmatprep.subr.bf16.mxu0 0
    %515 = vmatpush1.bf16.msra.mxu0 %v380
    %516 = vmatprep.subr.bf16.mxu0 0
    %517 = vmatpush1.bf16.msra.mxu0 %v381
    %518 = vmatprep.subr.bf16.mxu0 0
    %519 = vmatpush1.bf16.msra.mxu0 %v382
    %520 = vmatprep.subr.bf16.mxu0 0
    %521 = vmatpush1.bf16.msra.mxu0 %v383
    %522 = vmatprep.subr.bf16.mxu0 0
    %523 = vmatpush1.bf16.msra.mxu0 %v384
    %524 = vmatprep.subr.bf16.mxu0 0
    %525 = vmatpush1.bf16.msra.mxu0 %v385
    %526 = vmatprep.subr.bf16.mxu0 0
    %527 = vmatpush1.bf16.msra.mxu0 %v386
    %528 = vmatprep.subr.bf16.mxu0 0
    %529 = vmatpush1.bf16.msra.mxu0 %v387
    %530 = vmatprep.mubr.bf16.mxu0 %v51
    %531 = vmatmul.mubr.bf16.gmra.mrb[0].mxu0 %v50
    %v532 = vpop.f32.mrb[0].mxu0
    %v533 = vadd.f32 %v493, %v532
    %v534 = vpop.f32.mrb[0].mxu0
    %v535 = vpop.f32.mrb[0].mxu0
    %v536 = vpop.f32.mrb[0].mxu0
    %537 = vdwg.mxu0
    %538 = vmatprep.subr.bf16.mxu0 0
    %539 = vmatpush1.bf16.msra.mxu0 %v388
    %540 = vmatprep.subr.bf16.mxu0 0
    %541 = vmatpush1.bf16.msra.mxu0 %v389
    %542 = vmatprep.subr.bf16.mxu0 0
    %543 = vmatpush1.bf16.msra.mxu0 %v390
    %544 = vmatprep.subr.bf16.mxu0 0
    %545 = vmatpush1.bf16.msra.mxu0 %v391
    %546 = vmatprep.subr.bf16.mxu0 0
    %547 = vmatpush1.bf16.msra.mxu0 %v392
    %548 = vmatprep.subr.bf16.mxu0 0
    %549 = vmatpush1.bf16.msra.mxu0 %v393
    %550 = vmatprep.subr.bf16.mxu0 0
    %551 = vmatpush1.bf16.msra.mxu0 %v394
    %552 = vmatprep.subr.bf16.mxu0 0
    %553 = vmatpush1.bf16.msra.mxu0 %v395
    %554 = vmatprep.subr.bf16.mxu0 0
    %555 = vmatpush1.bf16.msra.mxu0 %v396
    %556 = vmatprep.subr.bf16.mxu0 0
    %557 = vmatpush1.bf16.msra.mxu0 %v397
    %558 = vmatprep.subr.bf16.mxu0 0
    %559 = vmatpush1.bf16.msra.mxu0 %v398
    %560 = vmatprep.subr.bf16.mxu0 0
    %561 = vmatpush1.bf16.msra.mxu0 %v399
    %562 = vmatprep.subr.bf16.mxu0 0
    %563 = vmatpush1.bf16.msra.mxu0 %v400
    %564 = vmatprep.subr.bf16.mxu0 0
    %565 = vmatpush1.bf16.msra.mxu0 %v401
    %566 = vmatprep.subr.bf16.mxu0 0
    %567 = vmatpush1.bf16.msra.mxu0 %v402
    %568 = vmatprep.subr.bf16.mxu0 0
    %569 = vmatpush1.bf16.msra.mxu0 %v403
    %570 = vmatprep.mubr.bf16.mxu0 %v53
    %571 = vmatmul.mubr.bf16.gmra.mrb[0].mxu0 %v52
    %v572 = vpop.f32.mrb[0].mxu0
    %v573 = vadd.f32 %v533, %v572
    %v574 = vpop.f32.mrb[0].mxu0
    %v575 = vpop.f32.mrb[0].mxu0
    %v576 = vpop.f32.mrb[0].mxu0
    %577 = vdwg.mxu0
    %578 = vmatprep.subr.bf16.mxu0 0
    %579 = vmatpush1.bf16.msra.mxu0 %v404
    %580 = vmatprep.subr.bf16.mxu0 0
    %581 = vmatpush1.bf16.msra.mxu0 0
    %582 = vmatprep.subr.bf16.mxu0 0
    %583 = vmatpush1.bf16.msra.mxu0 0
    %584 = vmatprep.subr.bf16.mxu0 0
    %585 = vmatpush1.bf16.msra.mxu0 0
    %586 = vmatprep.subr.bf16.mxu0 0
    %587 = vmatpush1.bf16.msra.mxu0 0
    %588 = vmatprep.subr.bf16.mxu0 0
    %589 = vmatpush1.bf16.msra.mxu0 0
    %590 = vmatprep.subr.bf16.mxu0 0
    %591 = vmatpush1.bf16.msra.mxu0 0
    %592 = vmatprep.subr.bf16.mxu0 0
    %593 = vmatpush1.bf16.msra.mxu0 0
    %594 = vmatprep.subr.bf16.mxu0 0
    %595 = vmatpush1.bf16.msra.mxu0 0
    %596 = vmatprep.subr.bf16.mxu0 0
    %597 = vmatpush1.bf16.msra.mxu0 0
    %598 = vmatprep.subr.bf16.mxu0 0
    %599 = vmatpush1.bf16.msra.mxu0 0
    %600 = vmatprep.subr.bf16.mxu0 0
    %601 = vmatpush1.bf16.msra.mxu0 0
    %602 = vmatprep.subr.bf16.mxu0 0
    %603 = vmatpush1.bf16.msra.mxu0 0
    %604 = vmatprep.subr.bf16.mxu0 0
    %605 = vmatpush1.bf16.msra.mxu0 0
    %606 = vmatprep.subr.bf16.mxu0 0
    %607 = vmatpush1.bf16.msra.mxu0 0
    %608 = vmatprep.subr.bf16.mxu0 0
    %609 = vmatpush1.bf16.msra.mxu0 0
    %610 = vmatprep.mubr.bf16.mxu0 0
    %611 = vmatmul.mubr.bf16.gmra.mrb[0].mxu0 %v456
    %v612 = vpop.f32.mrb[0].mxu0
    %v613 = vadd.f32 %v573, %v612
    %v614 = vpop.f32.mrb[0].mxu0
    %v615 = vpop.f32.mrb[0].mxu0
    %v616 = vpop.f32.mrb[0].mxu0
    %617 = vdwg.mxu0
    %v618 = vpack.c.bf16 %v613, %v613
    %619 = vst [vmem:[%s3] sm:$0xf] %v618
    // Predicated region
    $region22: #{nn_forward.1} parent=1 // pred_check
      _
    $region23: #{nn_forward.1} parent=1 // pred_check_branch
      %621 = sbr.rel (0) target = $region25
    $region24: #{nn_forward.1} parent=1 // pred_region
      _
    $region25: #{nn_forward.1} parent=1 // pred_fallthru
      _
    // Predicated region
    $region26: #{nn_forward.1} parent=1 // pred_check
      _
    $region27: #{nn_forward.1} parent=1 // pred_check_branch
      %623 = sbr.rel (0) target = $region29
    $region28: #{nn_forward.1} parent=1 // pred_region
      _
    $region29: #{nn_forward.1} parent=1 // pred_fallthru
      _
    %624 = vsyncpa [#allocation3], 1
    %625 = vsyncpa [#allocation5], 1

</llo_original>
